<compile_context>
chip_gen: v6e
topology: v6e:2x2x1
jax: 0.10.0
libtpu: 0.0.40
codegen_flags: <defaults>
</compile_context>

<pallas_src>
import math

import jax
import jax.numpy as jnp
from jax.experimental import pallas as pl
from jax.experimental.pallas import tpu as pltpu


def _cdiv(a, b):
    return -(-a // b)


def _round_down(x, m):
    return (x // m) * m


def _ve_forward_kernel(t_ref, x_ref, n_ref, o_ref):
    # t_ref: (b_blk, 1[, 1]) f32 sigma, broadcast over the slab.
    # x_ref / n_ref / o_ref: (b_blk, ...) lane-dense tiles in the input dtype.
    t = t_ref[...]
    x = x_ref[...].astype(jnp.float32)
    n = n_ref[...].astype(jnp.float32)
    o_ref[...] = (x + t * n).astype(o_ref.dtype)


def ve_forward(x, t, noise, *, target_block_bytes=4 << 20):
    """out[b, ...] = x[b, ...] + t[b] * noise[b, ...] (t broadcast per batch)."""
    orig_shape = x.shape
    assert noise.shape == orig_shape
    B = int(orig_shape[0])
    flat = int(math.prod(orig_shape[1:])) if len(orig_shape) > 1 else 1
    dtype = x.dtype
    itemsize = jnp.dtype(dtype).itemsize
    target = int(target_block_bytes)
    # Sublane granularity: 8 for 32-bit, 16 for 16-bit, 32 for 8-bit dtypes.
    sub = {4: 8, 2: 16, 1: 32}.get(itemsize, 8)

    # Normalize t to a per-batch f32 vector (accepts scalar, (B,), (B,1,1,1), ...).
    t = jnp.asarray(t, dtype=jnp.float32).reshape(-1)
    if t.size == 1:
        t = jnp.broadcast_to(t, (B,))
    assert t.shape == (B,), f"t must broadcast to ({B},), got shape {t.shape}"

    total_bytes = B * flat * itemsize

    if flat % 128 == 0:
        # -------- Primary path: lane-dense 3D layout (B, rows, LANE) --------
        LANE = 128
        for cand in (512, 256, 128):
            if flat % cand == 0:
                LANE = cand
                break
        rows = flat // LANE
        sample_bytes = flat * itemsize

        if sample_bytes >= target:
            # Large per-sample work: tile along rows.
            b_blk = 1
            rows_blk = min(rows, max(sub, _round_down(target // (LANE * itemsize), sub)))
        else:
            # Small per-sample work: pack multiple batch elements per block.
            rows_blk = rows
            b_blk = max(1, min(B, target // max(1, sample_bytes)))

        # v7x megacore: guarantee >= 2 grid blocks when the work is non-trivial.
        if total_bytes >= (1 << 20):
            for _ in range(8):
                if _cdiv(B, b_blk) * _cdiv(rows, rows_blk) >= 2:
                    break
                if b_blk > 1:
                    b_blk = _cdiv(b_blk, 2)
                elif rows > sub and rows_blk > sub:
                    rows_blk = max(sub, _round_down(_cdiv(rows_blk, 2), sub))
                else:
                    break

        x_r = x.reshape(B, rows, LANE)
        n_r = noise.reshape(B, rows, LANE)
        t_r = t.reshape(B, 1, 1)
        grid = (_cdiv(B, b_blk), _cdiv(rows, rows_blk))
        slab_spec = pl.BlockSpec((b_blk, rows_blk, LANE), lambda b, r: (b, r, 0))
        t_spec = pl.BlockSpec((b_blk, 1, 1), lambda b, r: (b, 0, 0))
        out_struct = jax.ShapeDtypeStruct((B, rows, LANE), dtype)
        block_bytes = b_blk * rows_blk * LANE * itemsize
    else:
        # -------- Fallback: ragged trailing size, 2D (B, flat) layout --------
        # No pad/slice copies; the ragged lane-edge block is masked by Pallas.
        def _batch_block(want):
            # block's sublane dim must be == B (full) or a multiple of `sub`.
            want = max(1, min(B, want))
            if want >= B or B <= sub:
                return B
            return max(sub, _round_down(want, sub))

        row_bytes = flat * itemsize
        if flat >= 128 and row_bytes >= target:
            b_blk = _batch_block(1)
            l_blk = min(flat, max(128, _round_down(
                max(128, target // (b_blk * itemsize)), 128)))
        else:
            b_blk = _batch_block(target // max(1, row_bytes))
            l_blk = flat

        x_r = x.reshape(B, flat)
        n_r = noise.reshape(B, flat)
        t_r = t.reshape(B, 1)
        grid = (_cdiv(B, b_blk), _cdiv(flat, l_blk))
        slab_spec = pl.BlockSpec((b_blk, l_blk), lambda b, f: (b, f))
        t_spec = pl.BlockSpec((b_blk, 1), lambda b, f: (b, 0))
        out_struct = jax.ShapeDtypeStruct((B, flat), dtype)
        block_bytes = b_blk * l_blk * itemsize

    # 3 operands x 2 pipeline buffers + slack; lift v5e's 16 MiB default when
    # needed, never ask for more than the v6e/v7x 32 MiB default scoped limit.
    vmem_limit = int(min(32 << 20, max(16 << 20, 6 * block_bytes + (2 << 20))))

    cost = pl.CostEstimate(
        flops=2 * B * flat,
        transcendentals=0,
        bytes_accessed=3 * B * flat * itemsize + B * 4,
    )

    out = pl.pallas_call(
        _ve_forward_kernel,
        out_shape=out_struct,
        grid=grid,
        in_specs=[t_spec, slab_spec, slab_spec],
        out_specs=slab_spec,
        compiler_params=pltpu.CompilerParams(
            dimension_semantics=("parallel", "parallel"),
            vmem_limit_bytes=vmem_limit),
        cost_estimate=cost,
    )(t_r, x_r, n_r)

    return out.reshape(orig_shape)


class VarianceExplodingKernel:
    """JAX/Pallas port of the PyTorch module (no learned parameters)."""

    def __init__(self, sigma_min, sigma_max, sigma_data):
        self.sigma_min = float(sigma_min)
        self.sigma_max = float(sigma_max)
        self.sigma_data = float(sigma_data)

    def forward(self, x, t, noise):
        return ve_forward(x, t, noise)

    # Scaling-factor helpers are pure scalar math (no hot path) -> plain JAX.
    def get_scaling_factors_bc(self, sigma):
        c_in = 1.0 / jnp.sqrt(self.sigma_data ** 2 + sigma ** 2)
        c_skip = self.sigma_data ** 2 / ((sigma - self.sigma_min) ** 2
                                         + self.sigma_data ** 2)
        c_out = (sigma - self.sigma_min) * self.sigma_data * c_in
        return c_in, c_skip, c_out

    def get_scaling_factors(self, sigma):
        c_in = 1.0 / jnp.sqrt(self.sigma_data ** 2 + sigma ** 2)
        c_skip = self.sigma_data ** 2 / (sigma ** 2 + self.sigma_data ** 2)
        c_out = sigma * self.sigma_data * c_in
        return c_in, c_skip, c_out


if __name__ == "__main__":
    key = jax.random.PRNGKey(0)
    kx, kt, kn = jax.random.split(key, 3)

    model = VarianceExplodingKernel(sigma_min=0.002, sigma_max=80.0,
                                    sigma_data=0.5)

    # --- Main check: f32, lane-dense path (CHW divisible by 128) -------------
    B, C, H, W = 2, 4, 16, 16
    x = jax.random.normal(kx, (B, C, H, W), dtype=jnp.float32)
    t = jax.random.uniform(kt, (B,), dtype=jnp.float32, minval=0.1, maxval=1.0)
    noise = jax.random.normal(kn, (B, C, H, W), dtype=jnp.float32)

    out = jax.block_until_ready(model.forward(x, t, noise))
    ref = x + t.reshape(B, 1, 1, 1) * noise
    assert out.shape == (B, C, H, W)
    assert jnp.allclose(out, ref, atol=1e-6, rtol=1e-6)

    # --- Ragged trailing size (no pad/slice path); t given as (B,1,1,1) ------
    x2 = jax.random.normal(kx, (2, 3, 5, 7), dtype=jnp.float32)
    n2 = jax.random.normal(kn, (2, 3, 5, 7), dtype=jnp.float32)
    t2 = jax.random.uniform(kt, (2, 1, 1, 1), dtype=jnp.float32,
                            minval=0.1, maxval=1.0)
    out2 = jax.block_until_ready(model.forward(x2, t2, n2))
    ref2 = x2 + t2 * n2
    assert out2.shape == x2.shape
    assert jnp.allclose(out2, ref2, atol=1e-6, rtol=1e-6)

    # --- Ragged row tiling (rows % rows_blk != 0) via a tiny block budget ----
    x3 = jax.random.normal(kx, (1, 11, 512), dtype=jnp.float32)
    n3 = jax.random.normal(kn, (1, 11, 512), dtype=jnp.float32)
    t3 = jnp.asarray([0.7], dtype=jnp.float32)
    out3 = jax.block_until_ready(ve_forward(x3, t3, n3, target_block_bytes=4096))
    ref3 = x3 + t3.reshape(1, 1, 1) * n3
    assert jnp.allclose(out3, ref3, atol=1e-6, rtol=1e-6)

    # --- Ragged batch tiling (B % b_blk != 0) ---------------------------------
    x4 = jax.random.normal(kx, (3, 2, 8, 8), dtype=jnp.float32)
    n4 = jax.random.normal(kn, (3, 2, 8, 8), dtype=jnp.float32)
    t4 = jax.random.uniform(kt, (3,), dtype=jnp.float32, minval=0.1, maxval=1.0)
    out4 = jax.block_until_ready(ve_forward(x4, t4, n4, target_block_bytes=1024))
    ref4 = x4 + t4.reshape(3, 1, 1, 1) * n4
    assert jnp.allclose(out4, ref4, atol=1e-6, rtol=1e-6)

    # --- Dtype preservation: bf16 in -> bf16 out (compute in f32) ------------
    xb = x.astype(jnp.bfloat16)
    nb = noise.astype(jnp.bfloat16)
    outb = jax.block_until_ready(model.forward(xb, t, nb))
    refb = (xb.astype(jnp.float32)
            + t.reshape(B, 1, 1, 1) * nb.astype(jnp.float32)).astype(jnp.bfloat16)
    assert outb.dtype == jnp.bfloat16
    assert jnp.allclose(outb.astype(jnp.float32), refb.astype(jnp.float32),
                        atol=1e-2, rtol=1e-2)

    print("KERNEL_OK")
</pallas_src>

<mosaic_0001>
module attributes {stable_mosaic.version = 11 : i64} {
  func.func @_ve_forward_kernel(%arg0: i32, %arg1: i32, %arg2: memref<2x1x1xf32, #tpu.memory_space<vmem>>, %arg3: memref<2x2x512xf32, #tpu.memory_space<vmem>>, %arg4: memref<2x2x512xf32, #tpu.memory_space<vmem>>, %arg5: memref<2x2x512xf32, #tpu.memory_space<vmem>>) attributes {dimension_semantics = [#tpu.dimension_semantics<parallel>, #tpu.dimension_semantics<parallel>], iteration_bounds = array<i64: 1, 1>, scalar_prefetch = 0 : i64, scratch_operands = 0 : i64, tpu.core_type = #tpu.core_type<tc>, window_params = [{transform_indices = @transform_0, window_bounds = array<i64: 2, 1, 1>}, {transform_indices = @transform_1, window_bounds = array<i64: 2, 2, 512>}, {transform_indices = @transform_2, window_bounds = array<i64: 2, 2, 512>}, {transform_indices = @transform_3, window_bounds = array<i64: 2, 2, 512>}]} {
    %c0 = arith.constant 0 : index
    %c0_0 = arith.constant 0 : index
    %c0_1 = arith.constant 0 : index
    %0 = vector.load %arg2[%c0, %c0_0, %c0_1] : memref<2x1x1xf32, #tpu.memory_space<vmem>>, vector<2x1x1xf32>
    %c0_2 = arith.constant 0 : index
    %c0_3 = arith.constant 0 : index
    %c0_4 = arith.constant 0 : index
    %1 = vector.load %arg3[%c0_2, %c0_3, %c0_4] : memref<2x2x512xf32, #tpu.memory_space<vmem>>, vector<2x2x512xf32>
    %c0_5 = arith.constant 0 : index
    %c0_6 = arith.constant 0 : index
    %c0_7 = arith.constant 0 : index
    %2 = vector.load %arg4[%c0_5, %c0_6, %c0_7] : memref<2x2x512xf32, #tpu.memory_space<vmem>>, vector<2x2x512xf32>
    %3 = vector.broadcast %0 : vector<2x1x1xf32> to vector<2x2x512xf32>
    %4 = arith.mulf %3, %2 : vector<2x2x512xf32>
    %5 = arith.addf %1, %4 : vector<2x2x512xf32>
    %c0_8 = arith.constant 0 : index
    %c0_9 = arith.constant 0 : index
    %c0_10 = arith.constant 0 : index
    %6 = vector.load %arg5[%c0_8, %c0_9, %c0_10] : memref<2x2x512xf32, #tpu.memory_space<vmem>>, vector<2x2x512xf32>
    tpu.vector_store %arg5[%c0_8, %c0_9, %c0_10], %5 {strides = array<i32>} : memref<2x2x512xf32, #tpu.memory_space<vmem>>, vector<2x2x512xf32>,
    return
  }
  func.func @transform_0(%arg0: i32, %arg1: i32) -> (i32, i32, i32) {
    %c0_i32 = arith.constant 0 : i32
    %c0_i32_0 = arith.constant 0 : i32
    %c0_i32_1 = arith.constant 0 : i32
    return %arg0, %c0_i32, %c0_i32_0 : i32, i32, i32
  }
  func.func @transform_1(%arg0: i32, %arg1: i32) -> (i32, i32, i32) {
    %c0_i32 = arith.constant 0 : i32
    %c0_i32_0 = arith.constant 0 : i32
    return %arg0, %arg1, %c0_i32 : i32, i32, i32
  }
  func.func @transform_2(%arg0: i32, %arg1: i32) -> (i32, i32, i32) {
    %c0_i32 = arith.constant 0 : i32
    %c0_i32_0 = arith.constant 0 : i32
    return %arg0, %arg1, %c0_i32 : i32, i32, i32
  }
  func.func @transform_3(%arg0: i32, %arg1: i32) -> (i32, i32, i32) {
    %c0_i32 = arith.constant 0 : i32
    %c0_i32_0 = arith.constant 0 : i32
    return %arg0, %arg1, %c0_i32 : i32, i32, i32
  }
}

</mosaic_0001>

<llo_original>
// kernel: tpu_custom_call.1
$region0: #{tpu_custom_call.1}
  #allocation0 [shape = 'u32[]', space=smem, size = 0x4, offset = 0x4, fixed_abs, tag = 'smem constant byte address 0x4 - core index']
  #allocation1 [shape = 'u32[144,128]{1,0:T(1,128)}', space=vmem, size = 0x12000, scoped, tag = 'internal scratch']
  %s0 = inlined_call_operand.vmem [shape: f32[2,1,1], index: 0, kind: input, shape index: {}]
  %s1 = inlined_call_operand.hbm [shape: f32[2,2,512], index: 1, kind: input, shape index: {}]
  %s2 = inlined_call_operand.hbm [shape: f32[2,2,512], index: 2, kind: input, shape index: {}]
  %s3 = inlined_call_operand.hbm [shape: f32[2,2,512], index: 3, kind: output, shape index: {}]
  %s4 = sld [smem:[#allocation0]]
  $region30: #{tpu_custom_call.1} parent=0
    _
  %s6 = ssub.s32 1, %s4
  %s7 = scalar_select 0, %s6, %s4
  $region1: #{tpu_custom_call.1} parent=0
    #allocation2 [shape = 'u8[8192]{0}', space=vmem, size = 0x2000, scoped, tag = 'input window, operand 1, single buffered']
    #allocation3 [shape = 's32[1]{0}', space=sflag, size = 0x4, scoped, tag = 'scoped memory for tpu_custom_call.1']
    #allocation4 [shape = 's32[1]{0}', space=sflag, size = 0x4, scoped, tag = 'scoped memory for tpu_custom_call.1']
    #allocation5 [shape = 'u8[8192]{0}', space=vmem, size = 0x2000, scoped, tag = 'input window, operand 2, single buffered']
    #allocation6 [shape = 's32[1]{0}', space=sflag, size = 0x4, scoped, tag = 'scoped memory for tpu_custom_call.1']
    #allocation7 [shape = 'u8[8192]{0}', space=vmem, size = 0x2000, scoped, tag = 'output window, operand 0, single buffered']
    %8 = vsyncpa [#allocation3], 0
    %9 = vsyncpa [#allocation6], 0
    %10 = vsyncpa [#allocation4], 0
    // Predicated region
    $region2: #{tpu_custom_call.1} parent=1 // pred_check
      _
    $region3: #{tpu_custom_call.1} parent=1 // pred_check_branch
      %12 = sbr.rel (0) target = $region5
    $region4: #{tpu_custom_call.1} parent=1 // pred_region
      _
    $region5: #{tpu_custom_call.1} parent=1 // pred_fallthru
      _
    // Predicated region
    $region6: #{tpu_custom_call.1} parent=1 // pred_check
      _
    $region7: #{tpu_custom_call.1} parent=1 // pred_check_branch
      %14 = sbr.rel (0) target = $region9
    $region8: #{tpu_custom_call.1} parent=1 // pred_region
      %s16 = ssub.s32 256, 256
      %17 = vsyncadd [#allocation3], %s16
      %s18 = sshll.u32 [#allocation2], 4
      %s19 = int_to_ptr.vmem [resolvable:$true] %s18
      %24 = dma.hbm_to_vmem [thread:$0]  %s1, 256, %s19, [#allocation3], 128, 128, 8
    $region9: #{tpu_custom_call.1} parent=1 // pred_fallthru
      _
    // Predicated region
    $region10: #{tpu_custom_call.1} parent=1 // pred_check
      _
    $region11: #{tpu_custom_call.1} parent=1 // pred_check_branch
      %26 = sbr.rel (0) target = $region13
    $region12: #{tpu_custom_call.1} parent=1 // pred_region
      %s28 = ssub.s32 256, 256
      %29 = vsyncadd [#allocation6], %s28
      %s30 = sshll.u32 [#allocation5], 4
      %s31 = int_to_ptr.vmem [resolvable:$true] %s30
      %36 = dma.hbm_to_vmem [thread:$0]  %s2, 256, %s31, [#allocation6], 128, 128, 8
    $region13: #{tpu_custom_call.1} parent=1 // pred_fallthru
      _
    // Predicated region
    $region14: #{tpu_custom_call.1} parent=1 // pred_check
      _
    $region15: #{tpu_custom_call.1} parent=1 // pred_check_branch
      %38 = sbr.rel (0) target = $region17
    $region16: #{tpu_custom_call.1} parent=1 // pred_region
      %39 = dma.done [#allocation3], 256
    $region17: #{tpu_custom_call.1} parent=1 // pred_fallthru
      _
    // Predicated region
    $region18: #{tpu_custom_call.1} parent=1 // pred_check
      _
    $region19: #{tpu_custom_call.1} parent=1 // pred_check_branch
      %41 = sbr.rel (0) target = $region21
    $region20: #{tpu_custom_call.1} parent=1 // pred_region
      %42 = dma.done [#allocation6], 256
    $region21: #{tpu_custom_call.1} parent=1 // pred_fallthru
      _
    %v43 = vld [vmem:[%s0] sm:$0x1]
    %v44 = vld [vmem:[%s0 + $0x1] sm:$0x1]
    %v45 = vld [vmem:[#allocation2] sm:$0xff]
    %v46 = vld [vmem:[#allocation2 + $0x8] sm:$0xff]
    %v47 = vld [vmem:[#allocation5] sm:$0xff]
    %v48 = vld [vmem:[#allocation5 + $0x8] sm:$0xff]
    %v51 = vlaneseq
    %v52 = vshrl.u32 %v51, 7
    %v53 = vsub.s32 0, %v52
    %v54 = vrot.slane %v43, %v53
    %v55 = vlaneseq
    %v56 = vshrl.u32 %v55, 7
    %v57 = vsub.s32 0, %v56
    %v58 = vrot.slane %v44, %v57
    %59 = vset.pattern.permute.xlu0 0
    %60 = vperm.xlu0 %59, %v54
    %v61 = vpop.permute.xlu0 %60
    %63 = vset.pattern.permute.xlu0 0
    %64 = vperm.xlu0 %63, %v58
    %v65 = vpop.permute.xlu0 %64
    %v67 = vmul.f32 %v61, %v47
    %v68 = vmul.f32 %v65, %v48
    %v69 = vadd.f32 %v45, %v67
    %v70 = vadd.f32 %v46, %v68
    %71 = vst [vmem:[#allocation7] sm:$0xff] %v69
    %72 = vst [vmem:[#allocation7 + $0x8] sm:$0xff] %v70
    // Predicated region
    $region22: #{tpu_custom_call.1} parent=1 // pred_check
      _
    $region23: #{tpu_custom_call.1} parent=1 // pred_check_branch
      %74 = sbr.rel (0) target = $region25
    $region24: #{tpu_custom_call.1} parent=1 // pred_region
      %s76 = ssub.s32 256, 256
      %77 = vsyncadd [#allocation4], %s76
      %s78 = sshll.u32 [#allocation7], 4
      %s79 = int_to_ptr.vmem [resolvable:$true] %s78
      %84 = dma.vmem_to_hbm [thread:$0]  %s79, 256, %s3, [#allocation4], 128, 128, 8
    $region25: #{tpu_custom_call.1} parent=1 // pred_fallthru
      _
    // Predicated region
    $region26: #{tpu_custom_call.1} parent=1 // pred_check
      _
    $region27: #{tpu_custom_call.1} parent=1 // pred_check_branch
      %86 = sbr.rel (0) target = $region29
    $region28: #{tpu_custom_call.1} parent=1 // pred_region
      %87 = dma.done [#allocation4], 256
    $region29: #{tpu_custom_call.1} parent=1 // pred_fallthru
      _
    %88 = vsyncpa [#allocation3], 1
    %89 = vsyncpa [#allocation6], 1
    %90 = vsyncpa [#allocation4], 1

</llo_original>
